<compile_context>
chip_gen: v6e
topology: v6e:2x2x1
jax: 0.10.0
libtpu: 0.0.40
codegen_flags: <defaults>
</compile_context>

<pallas_src>
import jax
import jax.numpy as jnp
from jax import lax
from jax.experimental import pallas as pl
from jax.experimental.pallas import tpu as pltpu

# ---- module "args" (small, deterministic) ----
B = 2              # batch
C_IN = 3           # input image channels
HW = 16            # spatial (HW*HW = 256, a multiple of 128, for the fused pool)
F_CONV = 16        # pooled conv feature dim (embedding.n_interm_feat stand-in)
DIM_FEATURES = 32  # args.dim_features
NUM_CLASSES = 8    # args.num_classes == ways; val_mem = identity (reset_prototypes)

EPS = 1e-12        # F.normalize-style clamp used by cosine_similarity_multi
TB = 8             # batch rows per grid step (sublane-aligned)
LANE = 128


def _round_up(n, m):
    return m * pl.cdiv(n, m)


def kvn_forward_kernel(y_ref, fcw_ref, keyT_ref, val_ref, out_ref):
    """Fused KeyValueNetwork forward hot path.

    y_ref   : (TB, F, S)  conv feature maps (pre-ReLU), spatial flattened on lanes
    fcw_ref : (F, Dp)     embedding final FC weight (zero-padded on D)
    keyT_ref: (Dp, Wp)    key memory, pre-transposed + zero-padded
    val_ref : (Wp, Cp)    value memory, zero-padded
    out_ref : (TB, Cp)    output logits (lane-dense; padded cols are exact zeros)
    """
    # backbone tail: ReLU + global average pool (lane reduction, XLU slot)
    y = jnp.maximum(y_ref[...], 0.0)
    feat = jnp.sum(y, axis=-1) * (1.0 / y_ref.shape[-1])                  # (TB, F)

    # embedding final FC -> query vectors
    q = jnp.dot(feat, fcw_ref[...], preferred_element_type=jnp.float32)  # (TB, Dp)

    # cosine similarity with normalization deferred until AFTER the matmul:
    #   sims = (q @ k^T) * rsqrt(max(|q|^2, eps^2)) * rsqrt(max(|k|^2, eps^2))
    kT = keyT_ref[...]
    sims_raw = jnp.dot(q, kT, preferred_element_type=jnp.float32)        # (TB, Wp)
    inv_q = lax.rsqrt(jnp.maximum(jnp.sum(q * q, axis=-1, keepdims=True),
                                  EPS * EPS))                            # (TB, 1) EUP
    inv_k = lax.rsqrt(jnp.maximum(jnp.sum(kT * kT, axis=0, keepdims=True),
                                  EPS * EPS))                            # (1, Wp) EUP
    sims = sims_raw * inv_q * inv_k

    # sharpening_activation = 'abs'; normalize_weightings = True, with the per-row
    # divide folded past the value matmul: out = (sharp @ val) * (1 / denom)
    sharp = jnp.abs(sims)
    denom = jnp.sum(sharp, axis=-1, keepdims=True)                       # (TB, 1)
    out_raw = jnp.dot(sharp, val_ref[...],
                      preferred_element_type=jnp.float32)                # (TB, Cp)
    # the clamp only guards all-zero *padded* batch rows; real rows have denom > 0
    inv_denom = pl.reciprocal(jnp.maximum(denom, 1e-30), approx=False)
    out_ref[...] = (out_raw * inv_denom).astype(out_ref.dtype)


@jax.jit
def kvn_forward(x_nchw, conv_w, fc_w, key_mem, val_mem):
    b, _, h, w = x_nchw.shape
    f = conv_w.shape[0]
    d = fc_w.shape[1]
    ways = key_mem.shape[0]
    c = val_mem.shape[1]
    s = h * w

    # --- embedding backbone stand-in (conv only; ReLU + pool are fused in-kernel) ---
    # TODO(synk): the real ResNet12/18/20 backbone is external to the provided module
    # source; a single conv3x3 stands in for it here (plain JAX glue).
    y = lax.conv_general_dilated(
        x_nchw, conv_w, (1, 1), ((1, 1), (1, 1)),
        dimension_numbers=("NCHW", "OIHW", "NCHW"))
    y = y.reshape(b, f, s)

    # --- lane/sublane-dense zero padding (sliced off after the call) ---
    bp = _round_up(b, TB)
    dp = _round_up(d, LANE)
    wp = _round_up(ways, LANE)
    cp = _round_up(c, LANE)

    y_p = jnp.pad(y, ((0, bp - b), (0, 0), (0, 0)))
    fcw_p = jnp.pad(fc_w, ((0, 0), (0, dp - d)))
    key_t_p = jnp.pad(key_mem, ((0, wp - ways), (0, dp - d))).T          # (Dp, Wp)
    val_p = jnp.pad(val_mem, ((0, wp - ways), (0, cp - c)))

    out_p = pl.pallas_call(
        kvn_forward_kernel,
        out_shape=jax.ShapeDtypeStruct((bp, cp), jnp.float32),
        grid=(bp // TB,),
        in_specs=[
            pl.BlockSpec((TB, f, s), lambda i: (i, 0, 0)),
            pl.BlockSpec((f, dp), lambda i: (0, 0)),
            pl.BlockSpec((dp, wp), lambda i: (0, 0)),
            pl.BlockSpec((wp, cp), lambda i: (0, 0)),
        ],
        out_specs=pl.BlockSpec((TB, cp), lambda i: (i, 0)),
        compiler_params=pltpu.CompilerParams(
            dimension_semantics=("parallel",)),
    )(y_p, fcw_p, key_t_p, val_p)

    return out_p[:b, :c]


def reference_forward(x_nchw, conv_w, fc_w, key_mem, val_mem):
    """Pure-JAX reference of the same forward semantics (normalize-then-dot)."""
    y = lax.conv_general_dilated(
        x_nchw, conv_w, (1, 1), ((1, 1), (1, 1)),
        dimension_numbers=("NCHW", "OIHW", "NCHW"))
    y = jnp.maximum(y, 0.0)
    feat = jnp.mean(y, axis=(2, 3))
    q = feat @ fc_w
    q_n = q / jnp.maximum(jnp.linalg.norm(q, axis=-1, keepdims=True), EPS)
    k_n = key_mem / jnp.maximum(jnp.linalg.norm(key_mem, axis=-1, keepdims=True), EPS)
    sims = q_n @ k_n.T
    sharp = jnp.abs(sims)
    wgt = sharp / jnp.sum(sharp, axis=1, keepdims=True)
    return wgt @ val_mem


if __name__ == "__main__":
    key = jax.random.PRNGKey(0)
    k_x, k_conv, k_fc, k_mem = jax.random.split(key, 4)

    # deterministic inputs / parameters
    x = jax.random.normal(k_x, (B, C_IN, HW, HW), dtype=jnp.float32)
    conv_w = 0.1 * jax.random.normal(k_conv, (F_CONV, C_IN, 3, 3), dtype=jnp.float32)
    fc_w = 0.1 * jax.random.normal(k_fc, (F_CONV, DIM_FEATURES), dtype=jnp.float32)
    key_mem = jax.random.normal(k_mem, (NUM_CLASSES, DIM_FEATURES), dtype=jnp.float32)
    val_mem = jnp.eye(NUM_CLASSES, dtype=jnp.float32)   # t.diag(t.ones(num_classes))

    out = jax.block_until_ready(kvn_forward(x, conv_w, fc_w, key_mem, val_mem))
    ref = reference_forward(x, conv_w, fc_w, key_mem, val_mem)

    assert out.shape == (B, NUM_CLASSES)
    assert jnp.allclose(out, ref, atol=1e-5, rtol=1e-5), "mismatch vs reference"

    print("KERNEL_OK")
</pallas_src>

<mosaic_0001>
module attributes {stable_mosaic.version = 11 : i64} {
  func.func @kvn_forward_kernel(%arg0: i32, %arg1: memref<8x16x256xf32, #tpu.memory_space<vmem>>, %arg2: memref<16x128xf32, #tpu.memory_space<vmem>>, %arg3: memref<128x128xf32, #tpu.memory_space<vmem>>, %arg4: memref<128x128xf32, #tpu.memory_space<vmem>>, %arg5: memref<8x128xf32, #tpu.memory_space<vmem>>) attributes {dimension_semantics = [#tpu.dimension_semantics<parallel>], iteration_bounds = array<i64: 1>, scalar_prefetch = 0 : i64, scratch_operands = 0 : i64, tpu.core_type = #tpu.core_type<tc>, window_params = [{transform_indices = @transform_0, window_bounds = array<i64: 8, 16, 256>}, {pipeline_mode = #tpu.pipeline_mode<synchronous>, transform_indices = @transform_1, window_bounds = array<i64: 16, 128>}, {pipeline_mode = #tpu.pipeline_mode<synchronous>, transform_indices = @transform_2, window_bounds = array<i64: 128, 128>}, {pipeline_mode = #tpu.pipeline_mode<synchronous>, transform_indices = @transform_3, window_bounds = array<i64: 128, 128>}, {transform_indices = @transform_4, window_bounds = array<i64: 8, 128>}]} {
    %c0 = arith.constant 0 : index
    %c0_0 = arith.constant 0 : index
    %c0_1 = arith.constant 0 : index
    %0 = vector.load %arg1[%c0, %c0_0, %c0_1] : memref<8x16x256xf32, #tpu.memory_space<vmem>>, vector<8x16x256xf32>
    %cst = arith.constant 0.000000e+00 : f32
    %1 = vector.broadcast %cst : f32 to vector<8x16x256xf32>
    %2 = arith.maximumf %0, %1 : vector<8x16x256xf32>
    %cst_2 = arith.constant dense<0.000000e+00> : vector<8x16xf32>
    %3 = vector.multi_reduction <add>, %2, %cst_2 [2] : vector<8x16x256xf32> to vector<8x16xf32>
    %cst_3 = arith.constant 3.906250e-03 : f32
    %4 = vector.broadcast %cst_3 : f32 to vector<8x16xf32>
    %5 = arith.mulf %3, %4 : vector<8x16xf32>
    %c0_4 = arith.constant 0 : index
    %c0_5 = arith.constant 0 : index
    %6 = vector.load %arg2[%c0_4, %c0_5] : memref<16x128xf32, #tpu.memory_space<vmem>>, vector<16x128xf32>
    %cst_6 = arith.constant dense<0.000000e+00> : vector<8x128xf32>
    %7 = tpu.matmul %5, %6, %cst_6 {dimension_numbers = #tpu.dot_dimension_numbers<[1], [0], [0], [1], [0, 0, 1, 1], [], []>} : vector<8x16xf32>, vector<16x128xf32>, vector<8x128xf32> -> vector<8x128xf32>
    %c0_7 = arith.constant 0 : index
    %c0_8 = arith.constant 0 : index
    %8 = vector.load %arg3[%c0_7, %c0_8] : memref<128x128xf32, #tpu.memory_space<vmem>>, vector<128x128xf32>
    %cst_9 = arith.constant dense<0.000000e+00> : vector<8x128xf32>
    %9 = tpu.matmul %7, %8, %cst_9 {dimension_numbers = #tpu.dot_dimension_numbers<[1], [0], [0], [1], [0, 0, 1, 1], [], []>} : vector<8x128xf32>, vector<128x128xf32>, vector<8x128xf32> -> vector<8x128xf32>
    %10 = arith.mulf %7, %7 : vector<8x128xf32>
    %cst_10 = arith.constant dense<0.000000e+00> : vector<8xf32>
    %11 = vector.multi_reduction <add>, %10, %cst_10 [1] : vector<8x128xf32> to vector<8xf32>
    %12 = vector.shape_cast %11 : vector<8xf32> to vector<8x1xf32>
    %cst_11 = arith.constant 1.000000e-24 : f32
    %13 = vector.broadcast %cst_11 : f32 to vector<8x1xf32>
    %14 = arith.maximumf %12, %13 : vector<8x1xf32>
    %15 = math.rsqrt %14 : vector<8x1xf32>
    %16 = arith.mulf %8, %8 : vector<128x128xf32>
    %cst_12 = arith.constant dense<0.000000e+00> : vector<128xf32>
    %17 = vector.multi_reduction <add>, %16, %cst_12 [0] : vector<128x128xf32> to vector<128xf32>
    %18 = vector.shape_cast %17 : vector<128xf32> to vector<1x128xf32>
    %cst_13 = arith.constant 1.000000e-24 : f32
    %19 = vector.broadcast %cst_13 : f32 to vector<1x128xf32>
    %20 = arith.maximumf %18, %19 : vector<1x128xf32>
    %21 = math.rsqrt %20 : vector<1x128xf32>
    %22 = vector.broadcast %15 : vector<8x1xf32> to vector<8x128xf32>
    %23 = arith.mulf %9, %22 : vector<8x128xf32>
    %24 = vector.broadcast %21 : vector<1x128xf32> to vector<8x128xf32>
    %25 = arith.mulf %23, %24 : vector<8x128xf32>
    %26 = math.absf %25 : vector<8x128xf32>
    %cst_14 = arith.constant dense<0.000000e+00> : vector<8xf32>
    %27 = vector.multi_reduction <add>, %26, %cst_14 [1] : vector<8x128xf32> to vector<8xf32>
    %28 = vector.shape_cast %27 : vector<8xf32> to vector<8x1xf32>
    %c0_15 = arith.constant 0 : index
    %c0_16 = arith.constant 0 : index
    %29 = vector.load %arg4[%c0_15, %c0_16] : memref<128x128xf32, #tpu.memory_space<vmem>>, vector<128x128xf32>
    %cst_17 = arith.constant dense<0.000000e+00> : vector<8x128xf32>
    %30 = tpu.matmul %26, %29, %cst_17 {dimension_numbers = #tpu.dot_dimension_numbers<[1], [0], [0], [1], [0, 0, 1, 1], [], []>} : vector<8x128xf32>, vector<128x128xf32>, vector<8x128xf32> -> vector<8x128xf32>
    %cst_18 = arith.constant 1.000000e-30 : f32
    %31 = vector.broadcast %cst_18 : f32 to vector<8x1xf32>
    %32 = arith.maximumf %28, %31 : vector<8x1xf32>
    %33 = tpu.reciprocal %32 : vector<8x1xf32> -> vector<8x1xf32>
    %34 = vector.broadcast %33 : vector<8x1xf32> to vector<8x128xf32>
    %35 = arith.mulf %30, %34 : vector<8x128xf32>
    %c0_19 = arith.constant 0 : index
    %c0_20 = arith.constant 0 : index
    %36 = vector.load %arg5[%c0_19, %c0_20] : memref<8x128xf32, #tpu.memory_space<vmem>>, vector<8x128xf32>
    tpu.vector_store %arg5[%c0_19, %c0_20], %35 {strides = array<i32>} : memref<8x128xf32, #tpu.memory_space<vmem>>, vector<8x128xf32>,
    return
  }
  func.func @transform_0(%arg0: i32) -> (i32, i32, i32) {
    %c0_i32 = arith.constant 0 : i32
    %c0_i32_0 = arith.constant 0 : i32
    %c0_i32_1 = arith.constant 0 : i32
    return %arg0, %c0_i32, %c0_i32_0 : i32, i32, i32
  }
  func.func @transform_1(%arg0: i32) -> (i32, i32) {
    %c0_i32 = arith.constant 0 : i32
    %c0_i32_0 = arith.constant 0 : i32
    %c0_i32_1 = arith.constant 0 : i32
    return %c0_i32, %c0_i32_0 : i32, i32
  }
  func.func @transform_2(%arg0: i32) -> (i32, i32) {
    %c0_i32 = arith.constant 0 : i32
    %c0_i32_0 = arith.constant 0 : i32
    %c0_i32_1 = arith.constant 0 : i32
    return %c0_i32, %c0_i32_0 : i32, i32
  }
  func.func @transform_3(%arg0: i32) -> (i32, i32) {
    %c0_i32 = arith.constant 0 : i32
    %c0_i32_0 = arith.constant 0 : i32
    %c0_i32_1 = arith.constant 0 : i32
    return %c0_i32, %c0_i32_0 : i32, i32
  }
  func.func @transform_4(%arg0: i32) -> (i32, i32) {
    %c0_i32 = arith.constant 0 : i32
    %c0_i32_0 = arith.constant 0 : i32
    return %arg0, %c0_i32 : i32, i32
  }
}

</mosaic_0001>

<llo_original>
// kernel: kvn_forward.1
$region0: #{kvn_forward.1}
  #allocation0 [shape = 'u32[]', space=smem, size = 0x4, offset = 0x4, fixed_abs, tag = 'smem constant byte address 0x4 - core index']
  #allocation1 [shape = 'u32[144,128]{1,0:T(1,128)}', space=vmem, size = 0x12000, scoped, tag = 'internal scratch']
  %s0 = inlined_call_operand.vmem [shape: f32[8,16,256], index: 0, kind: input, shape index: {}]
  %s1 = inlined_call_operand.vmem [shape: f32[16,128], index: 1, kind: input, shape index: {}]
  %s2 = inlined_call_operand.vmem [shape: f32[128,128], index: 2, kind: input, shape index: {}]
  %s3 = inlined_call_operand.vmem [shape: f32[128,128], index: 3, kind: input, shape index: {}]
  %s4 = inlined_call_operand.vmem [shape: f32[8,128], index: 4, kind: output, shape index: {}]
  %s5 = sld [smem:[#allocation0]]
  $region26: #{kvn_forward.1} parent=0
    _
  %s7 = ssub.s32 1, %s5
  %s8 = scalar_select 0, %s7, %s5
  // Predicated region
  $region2: #{kvn_forward.1} parent=0 // pred_check
    _
  $region3: #{kvn_forward.1} parent=0 // pred_check_branch
    %10 = sbr.rel (0) target = $region5
  $region4: #{kvn_forward.1} parent=0 // pred_region
    _
  $region5: #{kvn_forward.1} parent=0 // pred_fallthru
    _
  // Predicated region
  $region6: #{kvn_forward.1} parent=0 // pred_check
    _
  $region7: #{kvn_forward.1} parent=0 // pred_check_branch
    %12 = sbr.rel (0) target = $region9
  $region8: #{kvn_forward.1} parent=0 // pred_region
    _
  $region9: #{kvn_forward.1} parent=0 // pred_fallthru
    _
  // Predicated region
  $region10: #{kvn_forward.1} parent=0 // pred_check
    _
  $region11: #{kvn_forward.1} parent=0 // pred_check_branch
    %14 = sbr.rel (0) target = $region13
  $region12: #{kvn_forward.1} parent=0 // pred_region
    _
  $region13: #{kvn_forward.1} parent=0 // pred_fallthru
    _
  // Predicated region
  $region14: #{kvn_forward.1} parent=0 // pred_check
    _
  $region15: #{kvn_forward.1} parent=0 // pred_check_branch
    %16 = sbr.rel (0) target = $region17
  $region16: #{kvn_forward.1} parent=0 // pred_region
    _
  $region17: #{kvn_forward.1} parent=0 // pred_fallthru
    _
  %v17 = vld [vmem:[%s0] sm:$0xff]
  %v18 = vld [vmem:[%s0 + $0x8] sm:$0xff]
  %v19 = vld [vmem:[%s0 + $0x10] sm:$0xff]
  %v20 = vld [vmem:[%s0 + $0x18] sm:$0xff]
  %v21 = vld [vmem:[%s0 + $0x20] sm:$0xff]
  %v22 = vld [vmem:[%s0 + $0x28] sm:$0xff]
  %v23 = vld [vmem:[%s0 + $0x30] sm:$0xff]
  %v24 = vld [vmem:[%s0 + $0x38] sm:$0xff]
  %v25 = vld [vmem:[%s0 + $0x40] sm:$0xff]
  %v26 = vld [vmem:[%s0 + $0x48] sm:$0xff]
  %v27 = vld [vmem:[%s0 + $0x50] sm:$0xff]
  %v28 = vld [vmem:[%s0 + $0x58] sm:$0xff]
  %v29 = vld [vmem:[%s0 + $0x60] sm:$0xff]
  %v30 = vld [vmem:[%s0 + $0x68] sm:$0xff]
  %v31 = vld [vmem:[%s0 + $0x70] sm:$0xff]
  %v32 = vld [vmem:[%s0 + $0x78] sm:$0xff]
  %v33 = vld [vmem:[%s0 + $0x80] sm:$0xff]
  %v34 = vld [vmem:[%s0 + $0x88] sm:$0xff]
  %v35 = vld [vmem:[%s0 + $0x90] sm:$0xff]
  %v36 = vld [vmem:[%s0 + $0x98] sm:$0xff]
  %v37 = vld [vmem:[%s0 + $0xa0] sm:$0xff]
  %v38 = vld [vmem:[%s0 + $0xa8] sm:$0xff]
  %v39 = vld [vmem:[%s0 + $0xb0] sm:$0xff]
  %v40 = vld [vmem:[%s0 + $0xb8] sm:$0xff]
  %v41 = vld [vmem:[%s0 + $0xc0] sm:$0xff]
  %v42 = vld [vmem:[%s0 + $0xc8] sm:$0xff]
  %v43 = vld [vmem:[%s0 + $0xd0] sm:$0xff]
  %v44 = vld [vmem:[%s0 + $0xd8] sm:$0xff]
  %v45 = vld [vmem:[%s0 + $0xe0] sm:$0xff]
  %v46 = vld [vmem:[%s0 + $0xe8] sm:$0xff]
  %v47 = vld [vmem:[%s0 + $0xf0] sm:$0xff]
  %v48 = vld [vmem:[%s0 + $0xf8] sm:$0xff]
  %v49 = vmax.f32 %v17, 0.0
  %v50 = vmax.f32 %v18, 0.0
  %v51 = vmax.f32 %v19, 0.0
  %v52 = vmax.f32 %v20, 0.0
  %v53 = vmax.f32 %v21, 0.0
  %v54 = vmax.f32 %v22, 0.0
  %v55 = vmax.f32 %v23, 0.0
  %v56 = vmax.f32 %v24, 0.0
  %v57 = vmax.f32 %v25, 0.0
  %v58 = vmax.f32 %v26, 0.0
  %v59 = vmax.f32 %v27, 0.0
  %v60 = vmax.f32 %v28, 0.0
  %v61 = vmax.f32 %v29, 0.0
  %v62 = vmax.f32 %v30, 0.0
  %v63 = vmax.f32 %v31, 0.0
  %v64 = vmax.f32 %v32, 0.0
  %v65 = vmax.f32 %v33, 0.0
  %v66 = vmax.f32 %v34, 0.0
  %v67 = vmax.f32 %v35, 0.0
  %v68 = vmax.f32 %v36, 0.0
  %v69 = vmax.f32 %v37, 0.0
  %v70 = vmax.f32 %v38, 0.0
  %v71 = vmax.f32 %v39, 0.0
  %v72 = vmax.f32 %v40, 0.0
  %v73 = vmax.f32 %v41, 0.0
  %v74 = vmax.f32 %v42, 0.0
  %v75 = vmax.f32 %v43, 0.0
  %v76 = vmax.f32 %v44, 0.0
  %v77 = vmax.f32 %v45, 0.0
  %v78 = vmax.f32 %v46, 0.0
  %v79 = vmax.f32 %v47, 0.0
  %v80 = vmax.f32 %v48, 0.0
  %v81 = vadd.f32 %v49, %v50
  %82 = vadd.xlane.f32.xlu0 %v81
  %v83 = vpop.xlane.xlu0 %82
  %v84 = vadd.f32 %v51, %v52
  %85 = vadd.xlane.f32.xlu0 %v84
  %v86 = vpop.xlane.xlu0 %85
  %v87 = vadd.f32 %v53, %v54
  %88 = vadd.xlane.f32.xlu0 %v87
  %v89 = vpop.xlane.xlu0 %88
  %v90 = vadd.f32 %v55, %v56
  %91 = vadd.xlane.f32.xlu0 %v90
  %v92 = vpop.xlane.xlu0 %91
  %v93 = vadd.f32 %v57, %v58
  %94 = vadd.xlane.f32.xlu0 %v93
  %v95 = vpop.xlane.xlu0 %94
  %v96 = vadd.f32 %v59, %v60
  %97 = vadd.xlane.f32.xlu0 %v96
  %v98 = vpop.xlane.xlu0 %97
  %v99 = vadd.f32 %v61, %v62
  %100 = vadd.xlane.f32.xlu0 %v99
  %v101 = vpop.xlane.xlu0 %100
  %v102 = vadd.f32 %v63, %v64
  %103 = vadd.xlane.f32.xlu0 %v102
  %v104 = vpop.xlane.xlu0 %103
  %v105 = vadd.f32 %v65, %v66
  %106 = vadd.xlane.f32.xlu0 %v105
  %v107 = vpop.xlane.xlu0 %106
  %v108 = vadd.f32 %v67, %v68
  %109 = vadd.xlane.f32.xlu0 %v108
  %v110 = vpop.xlane.xlu0 %109
  %v111 = vadd.f32 %v69, %v70
  %112 = vadd.xlane.f32.xlu0 %v111
  %v113 = vpop.xlane.xlu0 %112
  %v114 = vadd.f32 %v71, %v72
  %115 = vadd.xlane.f32.xlu0 %v114
  %v116 = vpop.xlane.xlu0 %115
  %v117 = vadd.f32 %v73, %v74
  %118 = vadd.xlane.f32.xlu0 %v117
  %v119 = vpop.xlane.xlu0 %118
  %v120 = vadd.f32 %v75, %v76
  %121 = vadd.xlane.f32.xlu0 %v120
  %v122 = vpop.xlane.xlu0 %121
  %v123 = vadd.f32 %v77, %v78
  %124 = vadd.xlane.f32.xlu0 %v123
  %v125 = vpop.xlane.xlu0 %124
  %v126 = vadd.f32 %v79, %v80
  %127 = vadd.xlane.f32.xlu0 %v126
  %v128 = vpop.xlane.xlu0 %127
  %v129 = vmul.f32 %v83, 0.00390625
  %v130 = vmul.f32 %v86, 0.00390625
  %v131 = vmul.f32 %v89, 0.00390625
  %v132 = vmul.f32 %v92, 0.00390625
  %v133 = vmul.f32 %v95, 0.00390625
  %v134 = vmul.f32 %v98, 0.00390625
  %v135 = vmul.f32 %v101, 0.00390625
  %v136 = vmul.f32 %v104, 0.00390625
  %v137 = vmul.f32 %v107, 0.00390625
  %v138 = vmul.f32 %v110, 0.00390625
  %v139 = vmul.f32 %v113, 0.00390625
  %v140 = vmul.f32 %v116, 0.00390625
  %v141 = vmul.f32 %v119, 0.00390625
  %v142 = vmul.f32 %v122, 0.00390625
  %v143 = vmul.f32 %v125, 0.00390625
  %v144 = vmul.f32 %v128, 0.00390625
  %v145 = vld [vmem:[%s1] sm:$0xff]
  %v146 = vld [vmem:[%s1 + $0x8] sm:$0xff]
  %v163 = vlaneseq
  %v164 = vand.u32 %v163, 127
  %v165 = vlaneseq
  %v166 = vshrl.u32 %v165, 7
  %v167 = vsub.s32 %v164, %v166
  %v168 = vrot.slane %v129, %v167
  %v169 = vadd.s32 %v164, 4294967288
  %v170 = vlaneseq
  %v171 = vshrl.u32 %v170, 7
  %v172 = vsub.s32 %v169, %v171
  %v173 = vrot.slane %v130, %v172
  %vm174 = vcmask 130112
  %v175 = vsel %vm174, %v173, %v168
  %v176 = vlaneseq
  %v177 = vshrl.u32 %v176, 7
  %v178 = vsub.s32 %v164, %v177
  %v179 = vrot.slane %v131, %v178
  %v180 = vlaneseq
  %v181 = vshrl.u32 %v180, 7
  %v182 = vsub.s32 %v169, %v181
  %v183 = vrot.slane %v132, %v182
  %v184 = vsel %vm174, %v183, %v179
  %v185 = vlaneseq
  %v186 = vshrl.u32 %v185, 7
  %v187 = vsub.s32 %v164, %v186
  %v188 = vrot.slane %v133, %v187
  %v189 = vlaneseq
  %v190 = vshrl.u32 %v189, 7
  %v191 = vsub.s32 %v169, %v190
  %v192 = vrot.slane %v134, %v191
  %v193 = vsel %vm174, %v192, %v188
  %v194 = vlaneseq
  %v195 = vshrl.u32 %v194, 7
  %v196 = vsub.s32 %v164, %v195
  %v197 = vrot.slane %v135, %v196
  %v198 = vlaneseq
  %v199 = vshrl.u32 %v198, 7
  %v200 = vsub.s32 %v169, %v199
  %v201 = vrot.slane %v136, %v200
  %v202 = vsel %vm174, %v201, %v197
  %v203 = vlaneseq
  %v204 = vshrl.u32 %v203, 7
  %v205 = vsub.s32 %v164, %v204
  %v206 = vrot.slane %v137, %v205
  %v207 = vlaneseq
  %v208 = vshrl.u32 %v207, 7
  %v209 = vsub.s32 %v169, %v208
  %v210 = vrot.slane %v138, %v209
  %v211 = vsel %vm174, %v210, %v206
  %v212 = vlaneseq
  %v213 = vshrl.u32 %v212, 7
  %v214 = vsub.s32 %v164, %v213
  %v215 = vrot.slane %v139, %v214
  %v216 = vlaneseq
  %v217 = vshrl.u32 %v216, 7
  %v218 = vsub.s32 %v169, %v217
  %v219 = vrot.slane %v140, %v218
  %v220 = vsel %vm174, %v219, %v215
  %v221 = vlaneseq
  %v222 = vshrl.u32 %v221, 7
  %v223 = vsub.s32 %v164, %v222
  %v224 = vrot.slane %v141, %v223
  %v225 = vlaneseq
  %v226 = vshrl.u32 %v225, 7
  %v227 = vsub.s32 %v169, %v226
  %v228 = vrot.slane %v142, %v227
  %v229 = vsel %vm174, %v228, %v224
  %v230 = vlaneseq
  %v231 = vshrl.u32 %v230, 7
  %v232 = vsub.s32 %v164, %v231
  %v233 = vrot.slane %v143, %v232
  %v234 = vlaneseq
  %v235 = vshrl.u32 %v234, 7
  %v236 = vsub.s32 %v169, %v235
  %v237 = vrot.slane %v144, %v236
  %v238 = vsel %vm174, %v237, %v233
  %vm239 = vcmask 1041409
  %v240 = vsel %vm239, %v184, %v175
  %vm241 = vcmask 1042434
  %v242 = vsel %vm241, %v193, %v240
  %vm243 = vcmask 1043459
  %v244 = vsel %vm243, %v202, %v242
  %vm245 = vcmask 1044484
  %v246 = vsel %vm245, %v211, %v244
  %vm247 = vcmask 1045509
  %v248 = vsel %vm247, %v220, %v246
  %vm249 = vcmask 1046534
  %v250 = vsel %vm249, %v229, %v248
  %vm251 = vcmask 1047559
  %v252 = vsel %vm251, %v238, %v250
  %vm253 = vcmask 130048
  %v254 = vsel %vm253, %v252, 0
  %256 = vmatprep.subr.mxu0 0.0
  %257 = vmatpush1.msra.mxu0 0.0
  %258 = vmatprep.subr.mxu0 0.0
  %259 = vmatpush1.msra.mxu0 0.0
  %260 = vmatprep.subr.mxu0 0.0
  %261 = vmatpush1.msra.mxu0 0.0
  %262 = vmatprep.subr.mxu0 0.0
  %263 = vmatpush1.msra.mxu0 0.0
  %264 = vmatprep.subr.mxu0 0.0
  %265 = vmatpush1.msra.mxu0 0.0
  %266 = vmatprep.subr.mxu0 0.0
  %267 = vmatpush1.msra.mxu0 0.0
  %268 = vmatprep.subr.mxu0 0.0
  %269 = vmatpush1.msra.mxu0 0.0
  %270 = vmatprep.subr.mxu0 0.0
  %271 = vmatpush1.msra.mxu0 0.0
  %272 = vmatprep.subr.mxu0 0.0
  %273 = vmatpush1.msra.mxu0 0.0
  %274 = vmatprep.subr.mxu0 0.0
  %275 = vmatpush1.msra.mxu0 0.0
  %276 = vmatprep.subr.mxu0 0.0
  %277 = vmatpush1.msra.mxu0 0.0
  %278 = vmatprep.subr.mxu0 0.0
  %279 = vmatpush1.msra.mxu0 0.0
  %280 = vmatprep.subr.mxu0 0.0
  %281 = vmatpush1.msra.mxu0 0.0
  %282 = vmatprep.subr.mxu0 0.0
  %283 = vmatpush1.msra.mxu0 0.0
  %284 = vmatprep.subr.mxu0 0.0
  %285 = vmatpush1.msra.mxu0 %v146
  %286 = vmatprep.subr.mxu0 0.0
  %287 = vmatpush1.msra.mxu0 %v145
  %288 = vmatprep.subr.mxu0 0.0
  %289 = vmatpush2.msra.mxu0 0.0
  %290 = vmatprep.subr.mxu0 0.0
  %291 = vmatpush2.msra.mxu0 0.0
  %292 = vmatprep.subr.mxu0 0.0
  %293 = vmatpush2.msra.mxu0 0.0
  %294 = vmatprep.subr.mxu0 0.0
  %295 = vmatpush2.msra.mxu0 0.0
  %296 = vmatprep.subr.mxu0 0.0
  %297 = vmatpush2.msra.mxu0 0.0
  %298 = vmatprep.subr.mxu0 0.0
  %299 = vmatpush2.msra.mxu0 0.0
  %300 = vmatprep.subr.mxu0 0.0
  %301 = vmatpush2.msra.mxu0 0.0
  %302 = vmatprep.subr.mxu0 0.0
  %303 = vmatpush2.msra.mxu0 0.0
  %304 = vmatprep.subr.mxu0 0.0
  %305 = vmatpush2.msra.mxu0 0.0
  %306 = vmatprep.subr.mxu0 0.0
  %307 = vmatpush2.msra.mxu0 0.0
  %308 = vmatprep.subr.mxu0 0.0
  %309 = vmatpush2.msra.mxu0 0.0
  %310 = vmatprep.subr.mxu0 0.0
  %311 = vmatpush2.msra.mxu0 0.0
  %312 = vmatprep.subr.mxu0 0.0
  %313 = vmatpush2.msra.mxu0 0.0
  %314 = vmatprep.subr.mxu0 0.0
  %315 = vmatpush2.msra.mxu0 0.0
  %316 = vmatprep.subr.mxu0 0.0
  %317 = vmatpush2.msra.mxu0 0.0
  %318 = vmatprep.subr.mxu0 0.0
  %319 = vmatpush2.msra.mxu0 0.0
  %320 = vmatprep.mubr.f32.mxu0 0.0
  %321 = vmatmul.mubr.f32.gmra.mxu0 %v254
  %v322 = vpop.f32.mrf.mxu0
  %v323 = vadd.f32 0.0, %v322
  %v324 = vpop.f32.mrf.mxu0
  %325 = vdwg.mxu0
  %v326 = vld [vmem:[%s2] sm:$0xff]
  %v327 = vld [vmem:[%s2 + $0x8] sm:$0xff]
  %v328 = vld [vmem:[%s2 + $0x10] sm:$0xff]
  %v329 = vld [vmem:[%s2 + $0x18] sm:$0xff]
  %v330 = vld [vmem:[%s2 + $0x20] sm:$0xff]
  %v331 = vld [vmem:[%s2 + $0x28] sm:$0xff]
  %v332 = vld [vmem:[%s2 + $0x30] sm:$0xff]
  %v333 = vld [vmem:[%s2 + $0x38] sm:$0xff]
  %v334 = vld [vmem:[%s2 + $0x40] sm:$0xff]
  %v335 = vld [vmem:[%s2 + $0x48] sm:$0xff]
  %v336 = vld [vmem:[%s2 + $0x50] sm:$0xff]
  %v337 = vld [vmem:[%s2 + $0x58] sm:$0xff]
  %v338 = vld [vmem:[%s2 + $0x60] sm:$0xff]
  %v339 = vld [vmem:[%s2 + $0x68] sm:$0xff]
  %v340 = vld [vmem:[%s2 + $0x70] sm:$0xff]
  %v341 = vld [vmem:[%s2 + $0x78] sm:$0xff]
  %342 = vmatprep.subr.mxu0 0.0
  %343 = vmatpush1.msra.mxu0 %v341
  %344 = vmatprep.subr.mxu0 0.0
  %345 = vmatpush1.msra.mxu0 %v340
  %346 = vmatprep.subr.mxu0 0.0
  %347 = vmatpush1.msra.mxu0 %v339
  %348 = vmatprep.subr.mxu0 0.0
  %349 = vmatpush1.msra.mxu0 %v338
  %350 = vmatprep.subr.mxu0 0.0
  %351 = vmatpush1.msra.mxu0 %v337
  %352 = vmatprep.subr.mxu0 0.0
  %353 = vmatpush1.msra.mxu0 %v336
  %354 = vmatprep.subr.mxu0 0.0
  %355 = vmatpush1.msra.mxu0 %v335
  %356 = vmatprep.subr.mxu0 0.0
  %357 = vmatpush1.msra.mxu0 %v334
  %358 = vmatprep.subr.mxu0 0.0
  %359 = vmatpush1.msra.mxu0 %v333
  %360 = vmatprep.subr.mxu0 0.0
  %361 = vmatpush1.msra.mxu0 %v332
  %362 = vmatprep.subr.mxu0 0.0
  %363 = vmatpush1.msra.mxu0 %v331
  %364 = vmatprep.subr.mxu0 0.0
  %365 = vmatpush1.msra.mxu0 %v330
  %366 = vmatprep.subr.mxu0 0.0
  %367 = vmatpush1.msra.mxu0 %v329
  %368 = vmatprep.subr.mxu0 0.0
  %369 = vmatpush1.msra.mxu0 %v328
  %370 = vmatprep.subr.mxu0 0.0
  %371 = vmatpush1.msra.mxu0 %v327
  %372 = vmatprep.subr.mxu0 0.0
  %373 = vmatpush1.msra.mxu0 %v326
  %374 = vmatprep.subr.mxu0 0.0
  %375 = vmatpush2.msra.mxu0 0.0
  %376 = vmatprep.subr.mxu0 0.0
  %377 = vmatpush2.msra.mxu0 0.0
  %378 = vmatprep.subr.mxu0 0.0
  %379 = vmatpush2.msra.mxu0 0.0
  %380 = vmatprep.subr.mxu0 0.0
  %381 = vmatpush2.msra.mxu0 0.0
  %382 = vmatprep.subr.mxu0 0.0
  %383 = vmatpush2.msra.mxu0 0.0
  %384 = vmatprep.subr.mxu0 0.0
  %385 = vmatpush2.msra.mxu0 0.0
  %386 = vmatprep.subr.mxu0 0.0
  %387 = vmatpush2.msra.mxu0 0.0
  %388 = vmatprep.subr.mxu0 0.0
  %389 = vmatpush2.msra.mxu0 0.0
  %390 = vmatprep.subr.mxu0 0.0
  %391 = vmatpush2.msra.mxu0 0.0
  %392 = vmatprep.subr.mxu0 0.0
  %393 = vmatpush2.msra.mxu0 0.0
  %394 = vmatprep.subr.mxu0 0.0
  %395 = vmatpush2.msra.mxu0 0.0
  %396 = vmatprep.subr.mxu0 0.0
  %397 = vmatpush2.msra.mxu0 0.0
  %398 = vmatprep.subr.mxu0 0.0
  %399 = vmatpush2.msra.mxu0 0.0
  %400 = vmatprep.subr.mxu0 0.0
  %401 = vmatpush2.msra.mxu0 0.0
  %402 = vmatprep.subr.mxu0 0.0
  %403 = vmatpush2.msra.mxu0 0.0
  %404 = vmatprep.subr.mxu0 0.0
  %405 = vmatpush2.msra.mxu0 0.0
  %406 = vmatprep.mubr.f32.mxu0 0.0
  %407 = vmatmul.mubr.f32.gmra.mxu0 %v323
  %v408 = vpop.f32.mrf.mxu0
  %v409 = vadd.f32 0.0, %v408
  %v410 = vpop.f32.mrf.mxu0
  %411 = vdwg.mxu0
  %v412 = vmul.f32 %v323, %v323
  %413 = vadd.xlane.f32.xlu0 %v412
  %v414 = vpop.xlane.xlu0 %413
  %v415 = vmax.f32 %v414, 1e-24
  %v416 = vrsqrt.pop %v415
  %v417 = vmul.f32 %v326, %v326
  %v418 = vmul.f32 %v327, %v327
  %v419 = vmul.f32 %v328, %v328
  %v420 = vmul.f32 %v329, %v329
  %v421 = vmul.f32 %v330, %v330
  %v422 = vmul.f32 %v331, %v331
  %v423 = vmul.f32 %v332, %v332
  %v424 = vmul.f32 %v333, %v333
  %v425 = vmul.f32 %v334, %v334
  %v426 = vmul.f32 %v335, %v335
  %v427 = vmul.f32 %v336, %v336
  %v428 = vmul.f32 %v337, %v337
  %v429 = vmul.f32 %v338, %v338
  %v430 = vmul.f32 %v339, %v339
  %v431 = vmul.f32 %v340, %v340
  %v432 = vmul.f32 %v341, %v341
  %v433 = vadd.f32 %v417, %v418
  %v434 = vadd.f32 %v433, %v419
  %v435 = vadd.f32 %v434, %v420
  %v436 = vadd.f32 %v435, %v421
  %v437 = vadd.f32 %v436, %v422
  %v438 = vadd.f32 %v437, %v423
  %v439 = vadd.f32 %v438, %v424
  %v440 = vadd.f32 %v439, %v425
  %v441 = vadd.f32 %v440, %v426
  %v442 = vadd.f32 %v441, %v427
  %v443 = vadd.f32 %v442, %v428
  %v444 = vadd.f32 %v443, %v429
  %v445 = vadd.f32 %v444, %v430
  %v446 = vadd.f32 %v445, %v431
  %v447 = vadd.f32 %v446, %v432
  %v448 = vrot.slane %v447, 4
  %v449 = vadd.f32 %v447, %v448
  %v450 = vrot.slane %v449, 2
  %v451 = vadd.f32 %v449, %v450
  %v452 = vrot.slane %v451, 1
  %v453 = vadd.f32 %v451, %v452
  %v454 = vmax.f32 %v453, 1e-24
  %v455 = vrsqrt.pop %v454
  %v456 = vmul.f32 %v409, %v416
  %v457 = vmul.f32 %v456, %v455
  %v458 = vand.u32 2147483647, %v457
  %459 = vadd.xlane.f32.xlu0 %v458
  %v460 = vpop.xlane.xlu0 %459
  %v461 = vld [vmem:[%s3] sm:$0xff]
  %v462 = vld [vmem:[%s3 + $0x8] sm:$0xff]
  %v463 = vld [vmem:[%s3 + $0x10] sm:$0xff]
  %v464 = vld [vmem:[%s3 + $0x18] sm:$0xff]
  %v465 = vld [vmem:[%s3 + $0x20] sm:$0xff]
  %v466 = vld [vmem:[%s3 + $0x28] sm:$0xff]
  %v467 = vld [vmem:[%s3 + $0x30] sm:$0xff]
  %v468 = vld [vmem:[%s3 + $0x38] sm:$0xff]
  %v469 = vld [vmem:[%s3 + $0x40] sm:$0xff]
  %v470 = vld [vmem:[%s3 + $0x48] sm:$0xff]
  %v471 = vld [vmem:[%s3 + $0x50] sm:$0xff]
  %v472 = vld [vmem:[%s3 + $0x58] sm:$0xff]
  %v473 = vld [vmem:[%s3 + $0x60] sm:$0xff]
  %v474 = vld [vmem:[%s3 + $0x68] sm:$0xff]
  %v475 = vld [vmem:[%s3 + $0x70] sm:$0xff]
  %v476 = vld [vmem:[%s3 + $0x78] sm:$0xff]
  %477 = vmatprep.subr.mxu0 0.0
  %478 = vmatpush1.msra.mxu0 %v476
  %479 = vmatprep.subr.mxu0 0.0
  %480 = vmatpush1.msra.mxu0 %v475
  %481 = vmatprep.subr.mxu0 0.0
  %482 = vmatpush1.msra.mxu0 %v474
  %483 = vmatprep.subr.mxu0 0.0
  %484 = vmatpush1.msra.mxu0 %v473
  %485 = vmatprep.subr.mxu0 0.0
  %486 = vmatpush1.msra.mxu0 %v472
  %487 = vmatprep.subr.mxu0 0.0
  %488 = vmatpush1.msra.mxu0 %v471
  %489 = vmatprep.subr.mxu0 0.0
  %490 = vmatpush1.msra.mxu0 %v470
  %491 = vmatprep.subr.mxu0 0.0
  %492 = vmatpush1.msra.mxu0 %v469
  %493 = vmatprep.subr.mxu0 0.0
  %494 = vmatpush1.msra.mxu0 %v468
  %495 = vmatprep.subr.mxu0 0.0
  %496 = vmatpush1.msra.mxu0 %v467
  %497 = vmatprep.subr.mxu0 0.0
  %498 = vmatpush1.msra.mxu0 %v466
  %499 = vmatprep.subr.mxu0 0.0
  %500 = vmatpush1.msra.mxu0 %v465
  %501 = vmatprep.subr.mxu0 0.0
  %502 = vmatpush1.msra.mxu0 %v464
  %503 = vmatprep.subr.mxu0 0.0
  %504 = vmatpush1.msra.mxu0 %v463
  %505 = vmatprep.subr.mxu0 0.0
  %506 = vmatpush1.msra.mxu0 %v462
  %507 = vmatprep.subr.mxu0 0.0
  %508 = vmatpush1.msra.mxu0 %v461
  %509 = vmatprep.subr.mxu0 0.0
  %510 = vmatpush2.msra.mxu0 0.0
  %511 = vmatprep.subr.mxu0 0.0
  %512 = vmatpush2.msra.mxu0 0.0
  %513 = vmatprep.subr.mxu0 0.0
  %514 = vmatpush2.msra.mxu0 0.0
  %515 = vmatprep.subr.mxu0 0.0
  %516 = vmatpush2.msra.mxu0 0.0
  %517 = vmatprep.subr.mxu0 0.0
  %518 = vmatpush2.msra.mxu0 0.0
  %519 = vmatprep.subr.mxu0 0.0
  %520 = vmatpush2.msra.mxu0 0.0
  %521 = vmatprep.subr.mxu0 0.0
  %522 = vmatpush2.msra.mxu0 0.0
  %523 = vmatprep.subr.mxu0 0.0
  %524 = vmatpush2.msra.mxu0 0.0
  %525 = vmatprep.subr.mxu0 0.0
  %526 = vmatpush2.msra.mxu0 0.0
  %527 = vmatprep.subr.mxu0 0.0
  %528 = vmatpush2.msra.mxu0 0.0
  %529 = vmatprep.subr.mxu0 0.0
  %530 = vmatpush2.msra.mxu0 0.0
  %531 = vmatprep.subr.mxu0 0.0
  %532 = vmatpush2.msra.mxu0 0.0
  %533 = vmatprep.subr.mxu0 0.0
  %534 = vmatpush2.msra.mxu0 0.0
  %535 = vmatprep.subr.mxu0 0.0
  %536 = vmatpush2.msra.mxu0 0.0
  %537 = vmatprep.subr.mxu0 0.0
  %538 = vmatpush2.msra.mxu0 0.0
  %539 = vmatprep.subr.mxu0 0.0
  %540 = vmatpush2.msra.mxu0 0.0
  %541 = vmatprep.mubr.f32.mxu0 0.0
  %542 = vmatmul.mubr.f32.gmra.mxu0 %v458
  %v543 = vpop.f32.mrf.mxu0
  %v544 = vadd.f32 0.0, %v543
  %v545 = vpop.f32.mrf.mxu0
  %546 = vdwg.mxu0
  %v547 = vmax.f32 %v460, 1e-30
  %v548 = vrcp.pop %v547
  %v549 = vmul.f32 %v544, %v548
  %550 = vst [vmem:[%s4] sm:$0xff] %v549
  // Predicated region
  $region18: #{kvn_forward.1} parent=0 // pred_check
    _
  $region19: #{kvn_forward.1} parent=0 // pred_check_branch
    %552 = sbr.rel (0) target = $region21
  $region20: #{kvn_forward.1} parent=0 // pred_region
    _
  $region21: #{kvn_forward.1} parent=0 // pred_fallthru
    _
  // Predicated region
  $region22: #{kvn_forward.1} parent=0 // pred_check
    _
  $region23: #{kvn_forward.1} parent=0 // pred_check_branch
    %554 = sbr.rel (0) target = $region25
  $region24: #{kvn_forward.1} parent=0 // pred_region
    _
  $region25: #{kvn_forward.1} parent=0 // pred_fallthru
    _

</llo_original>
